<compile_context>
chip_gen: v6e
topology: v6e:2x2x1
jax: 0.10.0
libtpu: 0.0.40
codegen_flags: <defaults>
</compile_context>

<pallas_src>
import functools

import jax
import jax.numpy as jnp
from jax import lax
from jax.experimental import pallas as pl
from jax.experimental.pallas import tpu as pltpu

_NEG = -1e30  # masked (past-vocab) logit value -> exp() underflows to 0


def _round_up(x, m):
    return (x + m - 1) // m * m


def _round_down(x, m):
    return max(m, x // m * m)


def _vmem_capacity_bytes():
    try:
        return int(pltpu.get_tpu_info().vmem_capacity_bytes)
    except Exception:
        return 64 << 20  # conservative (v7x per-TC size); v5e/v6e have 128 MiB


def _largest_divisor_tile(total, base, cap):
    """Largest multiple of `base` that divides `total` and is <= cap."""
    best = base
    t = base
    limit = min(total, cap)
    while t <= limit:
        if total % t == 0:
            best = t
        t += base
    return best


def _logits_lse_kernel(x_ref, w_ref, b_ref, logits_ref, lse_ref, m_sc, l_sc,
                       *, v_tile, vocab, mask_tail):
    j = pl.program_id(1)

    @pl.when(j == 0)
    def _():
        m_sc[...] = jnp.full_like(m_sc, -jnp.inf)
        l_sc[...] = jnp.zeros_like(l_sc)

    # (row_tile, D) x (v_tile, D)^T on the MXU, f32 accumulation.  Operands were
    # already cast to matmul_dtype in the wrapper -> no per-tile VPU cast here.
    logits = lax.dot_general(
        x_ref[...], w_ref[...],
        dimension_numbers=(((1,), (1,)), ((), ())),
        preferred_element_type=jnp.float32,
    ) + b_ref[...].astype(jnp.float32)

    if mask_tail:
        # Mask columns past the true vocab (weight is NOT padded in HBM).
        cols = j * v_tile + lax.broadcasted_iota(jnp.int32, logits.shape, 1)
        logits = jnp.where(cols < vocab, logits, _NEG)

    logits_ref[...] = logits.astype(logits_ref.dtype)

    # Streaming, numerically stable log-sum-exp in f32 scratch.
    m_old = m_sc[...]
    m_new = jnp.maximum(m_old, jnp.max(logits, axis=-1, keepdims=True))
    l_sc[...] = (l_sc[...] * jnp.exp(m_old - m_new)
                 + jnp.sum(jnp.exp(logits - m_new), axis=-1, keepdims=True))
    m_sc[...] = m_new

    @pl.when(j == pl.num_programs(1) - 1)
    def _():
        lse_ref[...] = m_sc[...] + jnp.log(l_sc[...])


def _normalize_kernel(logits_ref, lse_ref, o_ref):
    o_ref[...] = (logits_ref[...].astype(jnp.float32)
                  - lse_ref[...]).astype(o_ref.dtype)


def projection_layer(x, weight, bias, *, row_tile=512, v_tile=1024,
                     matmul_dtype=None):
    """log_softmax(x @ weight.T + bias, axis=-1).

    x: (..., d_model); weight: (vocab, d_model) [PyTorch Linear layout];
    bias: (vocab,).  Returns (..., vocab) in x.dtype.
    """
    *lead, D = x.shape
    V, D_w = weight.shape
    assert D == D_w, "weight must be (vocab, d_model)"
    out_dtype = x.dtype
    if matmul_dtype is None:
        # bf16 operands + f32 accumulation: native MXU path on v5e/v6e/v7x.
        matmul_dtype = jnp.bfloat16

    rows = 1
    for d in lead:
        rows *= d

    row_tile = min(row_tile, _round_up(rows, 8))
    v_tile = min(v_tile, _round_up(V, 128))

    vmem_cap = _vmem_capacity_bytes()
    vmem_budget = max(vmem_cap - (8 << 20), 16 << 20)

    mm_size = jnp.dtype(matmul_dtype).itemsize
    out_size = jnp.dtype(out_dtype).itemsize

    def _estimate(rt, vt):
        # double-buffered in/out tiles + f32 scratch
        return (2 * (rt * D * mm_size + vt * D * mm_size + vt * 4
                     + rt * vt * out_size + rt * 4)
                + 2 * rt * 4)

    # Shrink tiles if the double-buffered working set would overflow VMEM
    # (matters for v7x's 64 MiB at large d_model).
    while _estimate(row_tile, v_tile) > vmem_budget and v_tile > 128:
        v_tile = _round_down(v_tile // 2, 128)
    while _estimate(row_tile, v_tile) > vmem_budget and row_tile > 8:
        row_tile = _round_down(row_tile // 2, 8)

    rows_pad = _round_up(rows, row_tile)
    grid_v = pl.cdiv(V, v_tile)
    v_pad = grid_v * v_tile
    mask_tail = (v_pad != V)

    # Cast once in the wrapper (ideally the caller keeps weights as bf16 in HBM).
    x2d = x.reshape(rows, D).astype(matmul_dtype)
    if rows_pad != rows:
        x2d = jnp.pad(x2d, ((0, rows_pad - rows), (0, 0)))
    w = weight.astype(matmul_dtype)            # (V, D), never padded
    b = bias.reshape(1, V).astype(jnp.float32)
    if v_pad != V:
        b = jnp.pad(b, ((0, 0), (0, v_pad - V)))  # tiny; tail is masked in-kernel

    grid = (rows_pad // row_tile, grid_v)
    est = _estimate(row_tile, v_tile)
    vmem_limit = int(min(max(int(est * 1.25) + (4 << 20), 32 << 20), vmem_budget))

    logits, lse = pl.pallas_call(
        functools.partial(_logits_lse_kernel, v_tile=v_tile, vocab=V,
                          mask_tail=mask_tail),
        out_shape=(
            jax.ShapeDtypeStruct((rows_pad, v_pad), out_dtype),
            jax.ShapeDtypeStruct((rows_pad, 1), jnp.float32),
        ),
        grid_spec=pltpu.PrefetchScalarGridSpec(
            num_scalar_prefetch=0,
            grid=grid,
            in_specs=[
                pl.BlockSpec((row_tile, D), lambda i, j: (i, 0)),   # x row tile
                pl.BlockSpec((v_tile, D), lambda i, j: (j, 0)),     # weight V tile
                pl.BlockSpec((1, v_tile), lambda i, j: (0, j)),     # bias V tile
            ],
            out_specs=[
                pl.BlockSpec((row_tile, v_tile), lambda i, j: (i, j)),  # raw logits
                pl.BlockSpec((row_tile, 1), lambda i, j: (i, 0)),       # lse (resident over j)
            ],
            scratch_shapes=[
                pltpu.VMEM((row_tile, 1), jnp.float32),  # running max
                pltpu.VMEM((row_tile, 1), jnp.float32),  # running sum-exp
            ],
        ),
        compiler_params=pltpu.CompilerParams(
            dimension_semantics=("parallel", "arbitrary"),
            vmem_limit_bytes=vmem_limit,
        ),
    )(x2d, w, b)

    # Elementwise normalization pass: out = logits - lse, in place (aliased),
    # with much larger lane-dense tiles (it is purely memory-bound).
    norm_rows = _largest_divisor_tile(rows_pad, row_tile, max(row_tile, 1024))
    tile_bytes_cap = vmem_budget // 6
    cap_v = max(128, (tile_bytes_cap // (norm_rows * out_size)) // 128 * 128)
    norm_v = _largest_divisor_tile(v_pad, 128, cap_v)
    norm_est = 2 * (2 * norm_rows * norm_v * out_size + norm_rows * 4)
    norm_vmem = int(min(max(int(norm_est * 1.25) + (4 << 20), 32 << 20),
                        vmem_budget))

    out = pl.pallas_call(
        _normalize_kernel,
        out_shape=jax.ShapeDtypeStruct((rows_pad, v_pad), out_dtype),
        grid=(rows_pad // norm_rows, v_pad // norm_v),
        in_specs=[
            pl.BlockSpec((norm_rows, norm_v), lambda i, j: (i, j)),
            pl.BlockSpec((norm_rows, 1), lambda i, j: (i, 0)),
        ],
        out_specs=pl.BlockSpec((norm_rows, norm_v), lambda i, j: (i, j)),
        input_output_aliases={0: 0},   # overwrite the logits buffer in place
        compiler_params=pltpu.CompilerParams(
            dimension_semantics=("parallel", "parallel"),
            vmem_limit_bytes=norm_vmem,
        ),
    )(logits, lse)

    return out[:rows, :V].reshape(*lead, V)


if __name__ == "__main__":
    key = jax.random.PRNGKey(0)
    proj = jax.jit(projection_layer)

    def ref_fn(x, w, b):
        logits = jnp.dot(x, w.T, precision=jax.lax.Precision.HIGHEST) + b
        return jax.nn.log_softmax(logits, axis=-1)

    # Test 1: tile-friendly shapes (batch=2, seq=8, d_model=32, vocab=128).
    B, S, D, V = 2, 8, 32, 128
    kx, kw, kb = jax.random.split(key, 3)
    bound = 1.0 / jnp.sqrt(jnp.float32(D))
    weight = jax.random.uniform(kw, (V, D), jnp.float32, -bound, bound)
    bias = jax.random.uniform(kb, (V,), jnp.float32, -bound, bound)
    x = jax.random.normal(kx, (B, S, D), jnp.float32)

    out = jax.block_until_ready(proj(x, weight, bias))
    ref = ref_fn(x, weight, bias)
    assert out.shape == (B, S, V)
    # bf16 matmul operands (f32 accumulation) -> bf16-appropriate tolerance.
    assert jnp.allclose(out, ref, atol=2e-2, rtol=2e-2), "mismatch vs reference (test 1)"

    # Test 2: ragged shapes (rows / vocab not multiples of the tiles) exercising
    # the in-kernel masked last vocab tile and the padded-row path.
    B2, S2, D2, V2 = 2, 5, 32, 200
    kx2, kw2, kb2 = jax.random.split(jax.random.PRNGKey(1), 3)
    bound2 = 1.0 / jnp.sqrt(jnp.float32(D2))
    weight2 = jax.random.uniform(kw2, (V2, D2), jnp.float32, -bound2, bound2)
    bias2 = jax.random.uniform(kb2, (V2,), jnp.float32, -bound2, bound2)
    x2 = jax.random.normal(kx2, (B2, S2, D2), jnp.float32)

    out2 = jax.block_until_ready(proj(x2, weight2, bias2))
    ref2 = ref_fn(x2, weight2, bias2)
    assert out2.shape == (B2, S2, V2)
    assert jnp.allclose(out2, ref2, atol=2e-2, rtol=2e-2), "mismatch vs reference (test 2)"

    print("KERNEL_OK")
</pallas_src>

<mosaic_0001>
module attributes {stable_mosaic.version = 11 : i64} {
  func.func @_logits_lse_kernel(%arg0: i32, %arg1: i32, %arg2: memref<16x32xbf16, #tpu.memory_space<vmem>>, %arg3: memref<128x32xbf16, #tpu.memory_space<vmem>>, %arg4: memref<1x128xf32, #tpu.memory_space<vmem>>, %arg5: memref<16x128xf32, #tpu.memory_space<vmem>>, %arg6: memref<16x1xf32, #tpu.memory_space<vmem>>, %arg7: memref<16x1xf32, #tpu.memory_space<vmem>>, %arg8: memref<16x1xf32, #tpu.memory_space<vmem>>) attributes {dimension_semantics = [#tpu.dimension_semantics<parallel>, #tpu.dimension_semantics<arbitrary>], iteration_bounds = array<i64: 1, 1>, scalar_prefetch = 0 : i64, scratch_operands = 2 : i64, tpu.core_type = #tpu.core_type<tc>, window_params = [{transform_indices = @transform_0, window_bounds = array<i64: 16, 32>}, {transform_indices = @transform_1, window_bounds = array<i64: 128, 32>}, {transform_indices = @transform_2, window_bounds = array<i64: 1, 128>}, {transform_indices = @transform_3, window_bounds = array<i64: 16, 128>}, {transform_indices = @transform_4, window_bounds = array<i64: 16, 1>}]} {
    %c0_i32 = arith.constant 0 : i32
    %0 = arith.cmpi eq, %arg1, %c0_i32 : i32
    %1 = arith.extui %0 : i1 to i32
    %c0_i32_0 = arith.constant 0 : i32
    %2 = arith.cmpi ne, %1, %c0_i32_0 : i32
    scf.if %2 {
      %cst_20 = arith.constant 0xFF800000 : f32
      %29 = vector.broadcast %cst_20 : f32 to vector<16x1xf32>
      %c0_21 = arith.constant 0 : index
      %c0_22 = arith.constant 0 : index
      %30 = vector.load %arg7[%c0_21, %c0_22] : memref<16x1xf32, #tpu.memory_space<vmem>>, vector<16x1xf32>
      tpu.vector_store %arg7[%c0_21, %c0_22], %29 {strides = array<i32>} : memref<16x1xf32, #tpu.memory_space<vmem>>, vector<16x1xf32>,
      %cst_23 = arith.constant 0.000000e+00 : f32
      %31 = vector.broadcast %cst_23 : f32 to vector<16x1xf32>
      %c0_24 = arith.constant 0 : index
      %c0_25 = arith.constant 0 : index
      %32 = vector.load %arg8[%c0_24, %c0_25] : memref<16x1xf32, #tpu.memory_space<vmem>>, vector<16x1xf32>
      tpu.vector_store %arg8[%c0_24, %c0_25], %31 {strides = array<i32>} : memref<16x1xf32, #tpu.memory_space<vmem>>, vector<16x1xf32>,
    } else {
    }
    %c0 = arith.constant 0 : index
    %c0_1 = arith.constant 0 : index
    %3 = vector.load %arg2[%c0, %c0_1] : memref<16x32xbf16, #tpu.memory_space<vmem>>, vector<16x32xbf16>
    %c0_2 = arith.constant 0 : index
    %c0_3 = arith.constant 0 : index
    %4 = vector.load %arg3[%c0_2, %c0_3] : memref<128x32xbf16, #tpu.memory_space<vmem>>, vector<128x32xbf16>
    %cst = arith.constant dense<0.000000e+00> : vector<16x128xf32>
    %5 = tpu.matmul %3, %4, %cst {dimension_numbers = #tpu.dot_dimension_numbers<[1], [1], [0], [0], [0, 0, 1, 0], [], []>} : vector<16x32xbf16>, vector<128x32xbf16>, vector<16x128xf32> -> vector<16x128xf32>
    %c0_4 = arith.constant 0 : index
    %c0_5 = arith.constant 0 : index
    %6 = vector.load %arg4[%c0_4, %c0_5] : memref<1x128xf32, #tpu.memory_space<vmem>>, vector<1x128xf32>
    %7 = vector.broadcast %6 : vector<1x128xf32> to vector<16x128xf32>
    %8 = arith.addf %5, %7 : vector<16x128xf32>
    %c0_6 = arith.constant 0 : index
    %c0_7 = arith.constant 0 : index
    %9 = vector.load %arg5[%c0_6, %c0_7] : memref<16x128xf32, #tpu.memory_space<vmem>>, vector<16x128xf32>
    tpu.vector_store %arg5[%c0_6, %c0_7], %8 {strides = array<i32>} : memref<16x128xf32, #tpu.memory_space<vmem>>, vector<16x128xf32>,
    %c0_8 = arith.constant 0 : index
    %c0_9 = arith.constant 0 : index
    %10 = vector.load %arg7[%c0_8, %c0_9] : memref<16x1xf32, #tpu.memory_space<vmem>>, vector<16x1xf32>
    %cst_10 = arith.constant dense<0xFF800000> : vector<16xf32>
    %11 = vector.multi_reduction <maximumf>, %8, %cst_10 [1] : vector<16x128xf32> to vector<16xf32>
    %12 = vector.shape_cast %11 : vector<16xf32> to vector<16x1xf32>
    %13 = arith.maximumf %10, %12 : vector<16x1xf32>
    %c0_11 = arith.constant 0 : index
    %c0_12 = arith.constant 0 : index
    %14 = vector.load %arg8[%c0_11, %c0_12] : memref<16x1xf32, #tpu.memory_space<vmem>>, vector<16x1xf32>
    %15 = arith.subf %10, %13 : vector<16x1xf32>
    %16 = math.exp %15 : vector<16x1xf32>
    %17 = arith.mulf %14, %16 : vector<16x1xf32>
    %18 = vector.broadcast %13 : vector<16x1xf32> to vector<16x128xf32>
    %19 = arith.subf %8, %18 : vector<16x128xf32>
    %20 = math.exp %19 : vector<16x128xf32>
    %cst_13 = arith.constant dense<0.000000e+00> : vector<16xf32>
    %21 = vector.multi_reduction <add>, %20, %cst_13 [1] : vector<16x128xf32> to vector<16xf32>
    %22 = vector.shape_cast %21 : vector<16xf32> to vector<16x1xf32>
    %23 = arith.addf %17, %22 : vector<16x1xf32>
    %c0_14 = arith.constant 0 : index
    %c0_15 = arith.constant 0 : index
    %24 = vector.load %arg8[%c0_14, %c0_15] : memref<16x1xf32, #tpu.memory_space<vmem>>, vector<16x1xf32>
    tpu.vector_store %arg8[%c0_14, %c0_15], %23 {strides = array<i32>} : memref<16x1xf32, #tpu.memory_space<vmem>>, vector<16x1xf32>,
    %c0_16 = arith.constant 0 : index
    %c0_17 = arith.constant 0 : index
    %25 = vector.load %arg7[%c0_16, %c0_17] : memref<16x1xf32, #tpu.memory_space<vmem>>, vector<16x1xf32>
    tpu.vector_store %arg7[%c0_16, %c0_17], %13 {strides = array<i32>} : memref<16x1xf32, #tpu.memory_space<vmem>>, vector<16x1xf32>,
    %c0_i32_18 = arith.constant 0 : i32
    %26 = arith.cmpi eq, %arg1, %c0_i32_18 : i32
    %27 = arith.extui %26 : i1 to i32
    %c0_i32_19 = arith.constant 0 : i32
    %28 = arith.cmpi ne, %27, %c0_i32_19 : i32
    scf.if %28 {
      %c0_20 = arith.constant 0 : index
      %c0_21 = arith.constant 0 : index
      %29 = vector.load %arg7[%c0_20, %c0_21] : memref<16x1xf32, #tpu.memory_space<vmem>>, vector<16x1xf32>
      %c0_22 = arith.constant 0 : index
      %c0_23 = arith.constant 0 : index
      %30 = vector.load %arg8[%c0_22, %c0_23] : memref<16x1xf32, #tpu.memory_space<vmem>>, vector<16x1xf32>
      %31 = math.log %30 : vector<16x1xf32>
      %32 = arith.addf %29, %31 : vector<16x1xf32>
      %c0_24 = arith.constant 0 : index
      %c0_25 = arith.constant 0 : index
      %33 = vector.load %arg6[%c0_24, %c0_25] : memref<16x1xf32, #tpu.memory_space<vmem>>, vector<16x1xf32>
      tpu.vector_store %arg6[%c0_24, %c0_25], %32 {strides = array<i32>} : memref<16x1xf32, #tpu.memory_space<vmem>>, vector<16x1xf32>,
    } else {
    }
    return
  }
  func.func @transform_0(%arg0: i32, %arg1: i32) -> (i32, i32) {
    %c0_i32 = arith.constant 0 : i32
    %c0_i32_0 = arith.constant 0 : i32
    return %arg0, %c0_i32 : i32, i32
  }
  func.func @transform_1(%arg0: i32, %arg1: i32) -> (i32, i32) {
    %c0_i32 = arith.constant 0 : i32
    %c0_i32_0 = arith.constant 0 : i32
    return %arg1, %c0_i32 : i32, i32
  }
  func.func @transform_2(%arg0: i32, %arg1: i32) -> (i32, i32) {
    %c0_i32 = arith.constant 0 : i32
    %c0_i32_0 = arith.constant 0 : i32
    return %c0_i32, %arg1 : i32, i32
  }
  func.func @transform_3(%arg0: i32, %arg1: i32) -> (i32, i32) {
    %c0_i32 = arith.constant 0 : i32
    return %arg0, %arg1 : i32, i32
  }
  func.func @transform_4(%arg0: i32, %arg1: i32) -> (i32, i32) {
    %c0_i32 = arith.constant 0 : i32
    %c0_i32_0 = arith.constant 0 : i32
    return %arg0, %c0_i32 : i32, i32
  }
}

module attributes {stable_mosaic.version = 11 : i64} {
  func.func @_normalize_kernel(%arg0: i32, %arg1: i32, %arg2: memref<16x128xf32, #tpu.memory_space<vmem>>, %arg3: memref<16x1xf32, #tpu.memory_space<vmem>>, %arg4: memref<16x128xf32, #tpu.memory_space<vmem>>) attributes {dimension_semantics = [#tpu.dimension_semantics<parallel>, #tpu.dimension_semantics<parallel>], iteration_bounds = array<i64: 1, 1>, scalar_prefetch = 0 : i64, scratch_operands = 0 : i64, tpu.core_type = #tpu.core_type<tc>, window_params = [{transform_indices = @transform_0, window_bounds = array<i64: 16, 128>}, {transform_indices = @transform_1, window_bounds = array<i64: 16, 1>}, {transform_indices = @transform_2, window_bounds = array<i64: 16, 128>}]} {
    %c0 = arith.constant 0 : index
    %c0_0 = arith.constant 0 : index
    %0 = vector.load %arg2[%c0, %c0_0] : memref<16x128xf32, #tpu.memory_space<vmem>>, vector<16x128xf32>
    %c0_1 = arith.constant 0 : index
    %c0_2 = arith.constant 0 : index
    %1 = vector.load %arg3[%c0_1, %c0_2] : memref<16x1xf32, #tpu.memory_space<vmem>>, vector<16x1xf32>
    %2 = vector.broadcast %1 : vector<16x1xf32> to vector<16x128xf32>
    %3 = arith.subf %0, %2 : vector<16x128xf32>
    %c0_3 = arith.constant 0 : index
    %c0_4 = arith.constant 0 : index
    %4 = vector.load %arg4[%c0_3, %c0_4] : memref<16x128xf32, #tpu.memory_space<vmem>>, vector<16x128xf32>
    tpu.vector_store %arg4[%c0_3, %c0_4], %3 {strides = array<i32>} : memref<16x128xf32, #tpu.memory_space<vmem>>, vector<16x128xf32>,
    return
  }
  func.func @transform_0(%arg0: i32, %arg1: i32) -> (i32, i32) {
    %c0_i32 = arith.constant 0 : i32
    return %arg0, %arg1 : i32, i32
  }
  func.func @transform_1(%arg0: i32, %arg1: i32) -> (i32, i32) {
    %c0_i32 = arith.constant 0 : i32
    %c0_i32_0 = arith.constant 0 : i32
    return %arg0, %c0_i32 : i32, i32
  }
  func.func @transform_2(%arg0: i32, %arg1: i32) -> (i32, i32) {
    %c0_i32 = arith.constant 0 : i32
    return %arg0, %arg1 : i32, i32
  }
}

</mosaic_0001>

<llo_original>
// kernel: projection_layer.3
$region0: #{projection_layer.3}
  #allocation0 [shape = 'u32[]', space=smem, size = 0x4, offset = 0x4, fixed_abs, tag = 'smem constant byte address 0x4 - core index']
  #allocation1 [shape = 'u32[144,128]{1,0:T(1,128)}', space=vmem, size = 0x12000, scoped, tag = 'internal scratch']
  %s0 = inlined_call_operand.vmem [shape: f32[16,128], index: 0, kind: input, shape index: {}, may-alias: {0,2}]
  %s1 = inlined_call_operand.vmem [shape: f32[16,1], index: 1, kind: input, shape index: {}]
  %s2 = inlined_call_operand.vmem [shape: f32[16,128], index: 2, kind: output, shape index: {}, may-alias: {0,2}]
  %s3 = sld [smem:[#allocation0]]
  $region18: #{projection_layer.3} parent=0
    _
  %s5 = ssub.s32 1, %s3
  %s6 = scalar_select 0, %s5, %s3
  // Predicated region
  $region2: #{projection_layer.3} parent=0 // pred_check
    _
  $region3: #{projection_layer.3} parent=0 // pred_check_branch
    %8 = sbr.rel (0) target = $region5
  $region4: #{projection_layer.3} parent=0 // pred_region
    _
  $region5: #{projection_layer.3} parent=0 // pred_fallthru
    _
  // Predicated region
  $region6: #{projection_layer.3} parent=0 // pred_check
    _
  $region7: #{projection_layer.3} parent=0 // pred_check_branch
    %10 = sbr.rel (0) target = $region9
  $region8: #{projection_layer.3} parent=0 // pred_region
    _
  $region9: #{projection_layer.3} parent=0 // pred_fallthru
    _
  %v11 = vld [vmem:[%s0] sm:$0xff]
  %v12 = vld [vmem:[%s0 + $0x8] sm:$0xff]
  %v13 = vld [vmem:[%s1] sm:$0xff]
  %v14 = vld [vmem:[%s1 + $0x8] sm:$0xff]
  %16 = vset.pattern.permute.xlu0 0
  %17 = vperm.xlu0 %16, %v13
  %v18 = vpop.permute.xlu0 %17
  %21 = vset.pattern.permute.xlu0 0
  %22 = vperm.xlu0 %21, %v14
  %v23 = vpop.permute.xlu0 %22
  %v25 = vsub.f32 %v11, %v18
  %v26 = vsub.f32 %v12, %v23
  %27 = vst [vmem:[%s2] sm:$0xff] %v25
  %28 = vst [vmem:[%s2 + $0x8] sm:$0xff] %v26
  // Predicated region
  $region10: #{projection_layer.3} parent=0 // pred_check
    _
  $region11: #{projection_layer.3} parent=0 // pred_check_branch
    %30 = sbr.rel (0) target = $region13
  $region12: #{projection_layer.3} parent=0 // pred_region
    _
  $region13: #{projection_layer.3} parent=0 // pred_fallthru
    _
  // Predicated region
  $region14: #{projection_layer.3} parent=0 // pred_check
    _
  $region15: #{projection_layer.3} parent=0 // pred_check_branch
    %32 = sbr.rel (0) target = $region17
  $region16: #{projection_layer.3} parent=0 // pred_region
    _
  $region17: #{projection_layer.3} parent=0 // pred_fallthru
    _

// kernel: projection_layer.2
$region0: #{projection_layer.2}
  #allocation0 [shape = 'u32[]', space=smem, size = 0x4, offset = 0x4, fixed_abs, tag = 'smem constant byte address 0x4 - core index']
  #allocation1 [shape = 'u32[144,128]{1,0:T(1,128)}', space=vmem, size = 0x12000, scoped, tag = 'internal scratch']
  #allocation2 [shape = 'f32[16,1]{1,0:T(8,128)}', space=vmem, size = 0x2000, scoped, tag = 'scratch operand']
  #allocation3 [shape = 'f32[16,1]{1,0:T(8,128)}', space=vmem, size = 0x2000, scoped, tag = 'scratch operand']
  %s0 = inlined_call_operand.vmem [shape: bf16[16,32], index: 0, kind: input, shape index: {}]
  %s1 = inlined_call_operand.vmem [shape: bf16[128,32], index: 1, kind: input, shape index: {}]
  %s2 = inlined_call_operand.vmem [shape: f32[1,128], index: 2, kind: input, shape index: {}]
  %s3 = inlined_call_operand.vmem [shape: f32[16,128], index: 3, kind: output, shape index: {0}]
  %s4 = inlined_call_operand.vmem [shape: f32[16,1], index: 4, kind: output, shape index: {1}]
  %5 = xla_tuple %s3, %s4
  %s6 = sld [smem:[#allocation0]]
  $region38: #{projection_layer.2} parent=0
    _
  %s8 = ssub.s32 1, %s6
  %s9 = scalar_select 0, %s8, %s6
  // Predicated region
  $region2: #{projection_layer.2} parent=0 // pred_check
    _
  $region3: #{projection_layer.2} parent=0 // pred_check_branch
    %11 = sbr.rel (0) target = $region5
  $region4: #{projection_layer.2} parent=0 // pred_region
    _
  $region5: #{projection_layer.2} parent=0 // pred_fallthru
    _
  // Predicated region
  $region6: #{projection_layer.2} parent=0 // pred_check
    _
  $region7: #{projection_layer.2} parent=0 // pred_check_branch
    %13 = sbr.rel (0) target = $region9
  $region8: #{projection_layer.2} parent=0 // pred_region
    _
  $region9: #{projection_layer.2} parent=0 // pred_fallthru
    _
  // Predicated region
  $region10: #{projection_layer.2} parent=0 // pred_check
    _
  $region11: #{projection_layer.2} parent=0 // pred_check_branch
    %15 = sbr.rel (0) target = $region13
  $region12: #{projection_layer.2} parent=0 // pred_region
    _
  $region13: #{projection_layer.2} parent=0 // pred_fallthru
    _
  %p17 = scmp.eq.s32.totalorder 0, 0
  // Predicated region
  $region14: #{projection_layer.2} parent=0 // pred_check
    %p18 = pneg %p17
  $region15: #{projection_layer.2} parent=0 // pred_check_branch
    %20 = sbr.rel (%p18) target = $region17
  $region16: #{projection_layer.2} parent=0 // pred_region
    %vm21 = vcmask 7168
    %22 = vst.msk [vmem:[#allocation2] sm:$0xff] %vm21, -inf
    %23 = vst.msk [vmem:[#allocation2 + $0x8] sm:$0xff] %vm21, -inf
    %24 = vst.msk [vmem:[#allocation3] sm:$0xff] %vm21, 0.0
    %25 = vst.msk [vmem:[#allocation3 + $0x8] sm:$0xff] %vm21, 0.0
  $region17: #{projection_layer.2} parent=0 // pred_fallthru
    _
  %v26 = vld [vmem:[%s0] sm:$0xf]
  %v27 = vld [vmem:[%s0 + $0x4] sm:$0xf]
  %v28 = vld [vmem:[%s1] sm:$0xf]
  %v29 = vld [vmem:[%s1 + $0x4] sm:$0xf]
  %v30 = vld [vmem:[%s1 + $0x8] sm:$0xf]
  %v31 = vld [vmem:[%s1 + $0xc] sm:$0xf]
  %v32 = vld [vmem:[%s1 + $0x10] sm:$0xf]
  %v33 = vld [vmem:[%s1 + $0x14] sm:$0xf]
  %v34 = vld [vmem:[%s1 + $0x18] sm:$0xf]
  %v35 = vld [vmem:[%s1 + $0x1c] sm:$0xf]
  %v36 = vld [vmem:[%s1 + $0x20] sm:$0xf]
  %v37 = vld [vmem:[%s1 + $0x24] sm:$0xf]
  %v38 = vld [vmem:[%s1 + $0x28] sm:$0xf]
  %v39 = vld [vmem:[%s1 + $0x2c] sm:$0xf]
  %v40 = vld [vmem:[%s1 + $0x30] sm:$0xf]
  %v41 = vld [vmem:[%s1 + $0x34] sm:$0xf]
  %v42 = vld [vmem:[%s1 + $0x38] sm:$0xf]
  %v43 = vld [vmem:[%s1 + $0x3c] sm:$0xf]
  %v44 = vld [vmem:[%s2] sm:$0x1]
  %v46 = vlaneseq
  %v47 = vshrl.u32 %v46, 7
  %v48 = vsub.s32 0, %v47
  %v49 = vrot.slane %v44, %v48
  %v53 = vunpack.c.l.b16 %v26
  %v54 = vunpack.c.l.b16 %v27
  %v55 = vpack.c.b16 %v54, %v53
  %v72 = vunpack.c.l.b16 %v28
  %v73 = vunpack.c.l.b16 %v29
  %v74 = vunpack.c.l.b16 %v30
  %v75 = vunpack.c.l.b16 %v31
  %v76 = vunpack.c.l.b16 %v32
  %v77 = vunpack.c.l.b16 %v33
  %v78 = vunpack.c.l.b16 %v34
  %v79 = vunpack.c.l.b16 %v35
  %v80 = vunpack.c.l.b16 %v36
  %v81 = vunpack.c.l.b16 %v37
  %v82 = vunpack.c.l.b16 %v38
  %v83 = vunpack.c.l.b16 %v39
  %v84 = vunpack.c.l.b16 %v40
  %v85 = vunpack.c.l.b16 %v41
  %v86 = vunpack.c.l.b16 %v42
  %v87 = vunpack.c.l.b16 %v43
  %v88 = vpack.c.b16 %v73, %v72
  %v89 = vpack.c.b16 %v75, %v74
  %v90 = vpack.c.b16 %v77, %v76
  %v91 = vpack.c.b16 %v79, %v78
  %v92 = vpack.c.b16 %v81, %v80
  %v93 = vpack.c.b16 %v83, %v82
  %v94 = vpack.c.b16 %v85, %v84
  %v95 = vpack.c.b16 %v87, %v86
  %vm96 = vcmask 261120
  %v98 = vsel %vm96, %v55, 0
  %v101 = vsel %vm96, %v88, 0
  %v104 = vsel %vm96, %v89, 0
  %v107 = vsel %vm96, %v90, 0
  %v110 = vsel %vm96, %v91, 0
  %v113 = vsel %vm96, %v92, 0
  %v116 = vsel %vm96, %v93, 0
  %v119 = vsel %vm96, %v94, 0
  %v122 = vsel %vm96, %v95, 0
  %124 = vmatprep.subr.bf16.mxu0 0
  %125 = vmatpush1.bf16.xpose.msra.mxu0 %v122
  %126 = vmatprep.subr.bf16.mxu0 0
  %127 = vmatpush1.bf16.xpose.msra.mxu0 %v119
  %128 = vmatprep.subr.bf16.mxu0 0
  %129 = vmatpush1.bf16.xpose.msra.mxu0 %v116
  %130 = vmatprep.subr.bf16.mxu0 0
  %131 = vmatpush1.bf16.xpose.msra.mxu0 %v113
  %132 = vmatprep.subr.bf16.mxu0 0
  %133 = vmatpush1.bf16.xpose.msra.mxu0 %v110
  %134 = vmatprep.subr.bf16.mxu0 0
  %135 = vmatpush1.bf16.xpose.msra.mxu0 %v107
  %136 = vmatprep.subr.bf16.mxu0 0
  %137 = vmatpush1.bf16.xpose.msra.mxu0 %v104
  %138 = vmatprep.subr.bf16.mxu0 0
  %139 = vmatpush1.bf16.xpose.msra.mxu0 %v101
  %140 = vmatprep.subr.bf16.mxu0 0
  %141 = vmatpush2.bf16.xpose.msra.mxu0 0
  %142 = vmatprep.subr.bf16.mxu0 0
  %143 = vmatpush2.bf16.xpose.msra.mxu0 0
  %144 = vmatprep.subr.bf16.mxu0 0
  %145 = vmatpush2.bf16.xpose.msra.mxu0 0
  %146 = vmatprep.subr.bf16.mxu0 0
  %147 = vmatpush2.bf16.xpose.msra.mxu0 0
  %148 = vmatprep.subr.bf16.mxu0 0
  %149 = vmatpush2.bf16.xpose.msra.mxu0 0
  %150 = vmatprep.subr.bf16.mxu0 0
  %151 = vmatpush2.bf16.xpose.msra.mxu0 0
  %152 = vmatprep.subr.bf16.mxu0 0
  %153 = vmatpush2.bf16.xpose.msra.mxu0 0
  %154 = vmatprep.subr.bf16.mxu0 0
  %155 = vmatpush2.bf16.xpose.msra.mxu0 0
  %156 = vmatprep.mubr.bf16.mxu0 0
  %157 = vmatmul.mubr.bf16.gmra.mxu0 %v98
  %v158 = vpop.f32.mrf.mxu0
  %v159 = vadd.f32 %v49, %v158
  %v160 = vpop.f32.mrf.mxu0
  %v161 = vpop.f32.mrf.mxu0
  %v162 = vadd.f32 %v49, %v161
  %v163 = vpop.f32.mrf.mxu0
  %164 = vdwg.mxu0
  %165 = vst [vmem:[%s3] sm:$0xff] %v159
  %166 = vst [vmem:[%s3 + $0x8] sm:$0xff] %v162
  %v167 = vld [vmem:[#allocation2] sm:$0xff]
  %v168 = vld [vmem:[#allocation2 + $0x8] sm:$0xff]
  %169 = vmax.xlane.f32.xlu0 %v159
  %v170 = vpop.xlane.xlu0 %169
  %171 = vmax.xlane.f32.xlu0 %v162
  %v172 = vpop.xlane.xlu0 %171
  %v173 = vmax.f32 %v167, %v170
  %v174 = vmax.f32 %v168, %v172
  %v175 = vld [vmem:[#allocation3] sm:$0xff]
  %v176 = vld [vmem:[#allocation3 + $0x8] sm:$0xff]
  %v177 = vsub.f32 %v167, %v173
  %v178 = vsub.f32 %v168, %v174
  %v179 = vmul.f32 %v177, 1.442695
  %v180 = vpow.pop %v179
  %v181 = vmul.f32 %v178, 1.442695
  %v182 = vpow.pop %v181
  %v183 = vmul.f32 %v175, %v180
  %v184 = vmul.f32 %v176, %v182
  %186 = vset.pattern.permute.xlu0 0
  %187 = vperm.xlu0 %186, %v173
  %v188 = vpop.permute.xlu0 %187
  %191 = vset.pattern.permute.xlu0 0
  %192 = vperm.xlu0 %191, %v174
  %v193 = vpop.permute.xlu0 %192
  %v195 = vsub.f32 %v159, %v188
  %v196 = vsub.f32 %v162, %v193
  %v197 = vmul.f32 %v195, 1.442695
  %v198 = vpow.pop %v197
  %v199 = vmul.f32 %v196, 1.442695
  %v200 = vpow.pop %v199
  %201 = vadd.xlane.f32.xlu0 %v198
  %v202 = vpop.xlane.xlu0 %201
  %203 = vadd.xlane.f32.xlu0 %v200
  %v204 = vpop.xlane.xlu0 %203
  %v205 = vadd.f32 %v183, %v202
  %v206 = vadd.f32 %v184, %v204
  %vm207 = vcmask 7168
  %208 = vst.msk [vmem:[#allocation3] sm:$0xff] %vm207, %v205
  %209 = vst.msk [vmem:[#allocation3 + $0x8] sm:$0xff] %vm207, %v206
  %210 = vst.msk [vmem:[#allocation2] sm:$0xff] %vm207, %v173
  %211 = vst.msk [vmem:[#allocation2 + $0x8] sm:$0xff] %vm207, %v174
  // Predicated region
  $region18: #{projection_layer.2} parent=0 // pred_check
    %p212 = pneg %p17
  $region19: #{projection_layer.2} parent=0 // pred_check_branch
    %214 = sbr.rel (%p212) target = $region21
  $region20: #{projection_layer.2} parent=0 // pred_region
    %v215 = vld [vmem:[#allocation2] sm:$0xff]
    %v216 = vld [vmem:[#allocation2 + $0x8] sm:$0xff]
    %v217 = vld [vmem:[#allocation3] sm:$0xff]
    %v218 = vld [vmem:[#allocation3 + $0x8] sm:$0xff]
    %v219 = vlog2.pop %v217
    %v220 = vmul.f32 %v219, 0.6931472
    %v221 = vlog2.pop %v218
    %v222 = vmul.f32 %v221, 0.6931472
    %v223 = vadd.f32 %v215, %v220
    %v224 = vadd.f32 %v216, %v222
    %225 = vst.msk [vmem:[%s4] sm:$0xff] %vm207, %v223
    %226 = vst.msk [vmem:[%s4 + $0x8] sm:$0xff] %vm207, %v224
  $region21: #{projection_layer.2} parent=0 // pred_fallthru
    _
  // Predicated region
  $region22: #{projection_layer.2} parent=0 // pred_check
    _
  $region23: #{projection_layer.2} parent=0 // pred_check_branch
    %228 = sbr.rel (0) target = $region25
  $region24: #{projection_layer.2} parent=0 // pred_region
    _
  $region25: #{projection_layer.2} parent=0 // pred_fallthru
    _
  // Predicated region
  $region26: #{projection_layer.2} parent=0 // pred_check
    _
  $region27: #{projection_layer.2} parent=0 // pred_check_branch
    %230 = sbr.rel (0) target = $region29
  $region28: #{projection_layer.2} parent=0 // pred_region
    _
  $region29: #{projection_layer.2} parent=0 // pred_fallthru
    _
  // Predicated region
  $region30: #{projection_layer.2} parent=0 // pred_check
    _
  $region31: #{projection_layer.2} parent=0 // pred_check_branch
    %232 = sbr.rel (0) target = $region33
  $region32: #{projection_layer.2} parent=0 // pred_region
    _
  $region33: #{projection_layer.2} parent=0 // pred_fallthru
    _
  // Predicated region
  $region34: #{projection_layer.2} parent=0 // pred_check
    _
  $region35: #{projection_layer.2} parent=0 // pred_check_branch
    %234 = sbr.rel (0) target = $region37
  $region36: #{projection_layer.2} parent=0 // pred_region
    _
  $region37: #{projection_layer.2} parent=0 // pred_fallthru
    _

</llo_original>
